<compile_context>
chip_gen: v7x
topology: tpu7x:2x2x1
jax: 0.10.0
libtpu: 0.0.40
codegen_flags: <defaults>
</compile_context>

<pallas_src>
import functools
import math

import jax
import jax.numpy as jnp
from jax import lax
from jax.experimental import pallas as pl
from jax.experimental.pallas import tpu as pltpu

_SUBLANE = 8
_TN_MAX = 256           # gathered rows per grid step (amortizes ~600-cycle step cost)
_L_CHUNK = 512          # matmul K chunk: multiple of 256 (v6e/v7x MXU) and 128 (v5e)
_ONEHOT_MAX_LEN = 2048  # tables at/above this use the DMA row-gather path


def _round_up(x, m):
    return ((x + m - 1) // m) * m


def _vmem_cap_bytes():
    """Per-core VMEM capacity minus headroom; conservative fallback fits all chips."""
    try:
        return int(pltpu.get_tpu_info().vmem_capacity_bytes) - (4 << 20)
    except Exception:
        return 60 << 20  # v7x has 64 MiB per TensorCore


# -----------------------------------------------------------------------------
# Path 1: small table resident in VMEM, gather via chunked one-hot MXU matmul.
# -----------------------------------------------------------------------------
def _onehot_gather_kernel(idx_ref, p0_ref, p1_ref, out_ref, *, l_chunk):
    """Gather PE rows with a chunked one-hot matmul on the MXU.

    idx_ref : VMEM (TN, 1)     int32  row indices for this output tile
    p*_ref  : VMEM (L_pad, D)  bf16   resident planes; p0 + p1 ~= pe (f32, ~5e-6 abs)
    out_ref : VMEM (TN, D)            gathered rows
    """
    tn, d = out_ref.shape
    l_pad = p0_ref.shape[0]
    n_chunks = l_pad // l_chunk

    idx = idx_ref[...]                                        # (tn, 1) int32
    col = lax.broadcasted_iota(jnp.int32, (tn, l_chunk), 1)   # (tn, LC)

    def body(c, acc):
        base = pl.multiple_of(c * l_chunk, l_chunk)
        # Direct compare -> bf16 cast (0/1 exact in bf16); no f32 select temporary.
        oh = (col == (idx - base)).astype(jnp.bfloat16)       # (tn, LC)
        acc = acc + jnp.dot(oh, p0_ref[pl.ds(base, l_chunk), :],
                            preferred_element_type=jnp.float32)
        acc = acc + jnp.dot(oh, p1_ref[pl.ds(base, l_chunk), :],
                            preferred_element_type=jnp.float32)
        return acc

    acc = lax.fori_loop(0, n_chunks, body,
                        jnp.zeros((tn, d), jnp.float32), unroll=True)
    out_ref[...] = acc.astype(out_ref.dtype)


@functools.partial(jax.jit, static_argnames=("max_len", "l_chunk", "out_dtype"))
def _onehot_forward(x_idx, p0, p1, *, max_len, l_chunk, out_dtype):
    orig_shape = x_idx.shape
    l_pad, d_model = p0.shape

    flat = x_idx.reshape(-1).astype(jnp.int32)
    # PyTorch indexing would raise on out-of-range indices; we clamp instead.
    flat = jnp.clip(flat, 0, max_len - 1)
    n = flat.shape[0]
    if n == 0:
        return jnp.zeros((*orig_shape, d_model), out_dtype)

    tn = min(_TN_MAX, _round_up(n, _SUBLANE))
    n_pad = _round_up(n, tn)
    idx = jnp.pad(flat, (0, n_pad - n)).reshape(n_pad, 1)

    # VMEM budget: double-buffered resident planes + idx/out tiles +
    # (tn, l_chunk) one-hot and (tn, d) f32 accumulator temporaries + headroom.
    plane_bytes = l_pad * d_model * 2
    tile_bytes = tn * d_model * (4 + jnp.dtype(out_dtype).itemsize) + tn * 4
    tmp_bytes = tn * l_chunk * 4 + tn * d_model * 4
    vmem_limit = 2 * 2 * plane_bytes + 2 * tile_bytes + tmp_bytes + (8 << 20)
    vmem_limit = int(min(max(vmem_limit, 16 << 20), _vmem_cap_bytes()))

    out = pl.pallas_call(
        functools.partial(_onehot_gather_kernel, l_chunk=l_chunk),
        out_shape=jax.ShapeDtypeStruct((n_pad, d_model), out_dtype),
        grid=(n_pad // tn,),
        in_specs=[
            pl.BlockSpec((tn, 1), lambda i: (i, 0)),           # index tile
            pl.BlockSpec((l_pad, d_model), lambda i: (0, 0)),  # plane 0 (resident)
            pl.BlockSpec((l_pad, d_model), lambda i: (0, 0)),  # plane 1 (resident)
        ],
        out_specs=pl.BlockSpec((tn, d_model), lambda i: (i, 0)),
        compiler_params=pltpu.CompilerParams(
            dimension_semantics=("parallel",),   # independent tiles; 2 TCs on v7x
            vmem_limit_bytes=vmem_limit,
        ),
    )(idx, p0, p1)

    if n_pad != n:
        out = out[:n]
    return out.reshape(*orig_shape, d_model)


# -----------------------------------------------------------------------------
# Path 2: large table stays in HBM; per-row DMA gather (memory-bound, no MXU).
# -----------------------------------------------------------------------------
def _dma_gather_kernel(idx_smem, pe_hbm, out_ref, row_buf, sem):
    """Row gather via per-row async DMA from the HBM-resident PE table.

    idx_smem : SMEM (n_pad,) int32   all row indices (scalar-prefetched)
    pe_hbm   : ANY  (max_len, D)     PE table, stays in HBM
    out_ref  : VMEM (TN, D)          output tile
    row_buf  : VMEM (TN, D)          gather landing buffer
    sem      : DMA semaphore (shared; all copies are the same size)
    """
    i = pl.program_id(0)
    tn = out_ref.shape[0]

    @pl.loop(0, tn)
    def _start(r):
        row = idx_smem[i * tn + r]
        pltpu.make_async_copy(pe_hbm.at[pl.ds(row, 1), :],
                              row_buf.at[pl.ds(r, 1), :], sem).start()

    @pl.loop(0, tn)
    def _wait(r):
        # Identical-size descriptor: one wait per issued copy on the shared sem.
        pltpu.make_async_copy(pe_hbm.at[pl.ds(0, 1), :],
                              row_buf.at[pl.ds(0, 1), :], sem).wait()

    out_ref[...] = row_buf[...].astype(out_ref.dtype)


@functools.partial(jax.jit, static_argnames=("max_len", "out_dtype"))
def _dma_forward(x_idx, pe, *, max_len, out_dtype):
    orig_shape = x_idx.shape
    _, d_model = pe.shape

    flat = jnp.clip(x_idx.reshape(-1).astype(jnp.int32), 0, max_len - 1)
    n = flat.shape[0]
    if n == 0:
        return jnp.zeros((*orig_shape, d_model), out_dtype)

    tn = min(_TN_MAX, _round_up(n, _SUBLANE))
    n_pad = _round_up(n, tn)
    idx = jnp.pad(flat, (0, n_pad - n))        # 1-D; scalar-prefetched into SMEM

    tile_bytes = tn * d_model * (pe.dtype.itemsize + jnp.dtype(out_dtype).itemsize)
    vmem_limit = int(min(max(4 * tile_bytes + (8 << 20), 16 << 20), _vmem_cap_bytes()))

    grid_spec = pltpu.PrefetchScalarGridSpec(
        num_scalar_prefetch=1,
        grid=(n_pad // tn,),
        in_specs=[pl.BlockSpec(memory_space=pl.ANY)],          # table stays in HBM
        out_specs=pl.BlockSpec((tn, d_model), lambda i, idx_ref: (i, 0)),
        scratch_shapes=[pltpu.VMEM((tn, d_model), pe.dtype),
                        pltpu.SemaphoreType.DMA],
    )
    out = pl.pallas_call(
        _dma_gather_kernel,
        out_shape=jax.ShapeDtypeStruct((n_pad, d_model), out_dtype),
        grid_spec=grid_spec,
        compiler_params=pltpu.CompilerParams(
            dimension_semantics=("arbitrary",),
            vmem_limit_bytes=vmem_limit,
        ),
    )(idx, pe)

    if n_pad != n:
        out = out[:n]
    return out.reshape(*orig_shape, d_model)


# -----------------------------------------------------------------------------
# Module-like wrapper (table prep hoisted out of the per-call path).
# -----------------------------------------------------------------------------
def make_pe_table(d_model, max_len=5000, offset_start=0, dtype=jnp.float32):
    """Deterministic sinusoidal table, matching the PyTorch __init__."""
    assert d_model % 2 == 0, "sinusoidal PE requires even d_model"
    position = jnp.arange(offset_start, offset_start + max_len,
                          dtype=jnp.float32)[:, None]              # (max_len, 1)
    div_term = jnp.exp(jnp.arange(0, d_model, 2, dtype=jnp.float32)
                       * (-(math.log(10000.0) / d_model)))          # (d_model//2,)
    angles = position * div_term[None, :]                           # (max_len, d/2)
    pe = jnp.stack([jnp.sin(angles), jnp.cos(angles)], axis=-1)     # interleave
    return pe.reshape(max_len, d_model).astype(dtype)


class ReturnPositionalEncoding:
    """JAX/Pallas port of the PyTorch module (eval-mode dropout == identity)."""

    def __init__(self, d_model, dropout, max_len=5000, offset_start=0,
                 out_dtype=None):
        self.d_model = d_model
        self.max_len = max_len
        self.dropout_p = dropout   # TODO(synk): training-mode dropout not implemented
        self.pe = make_pe_table(d_model, max_len, offset_start)
        # bf16 out_dtype halves output HBM traffic if the PE is added to bf16
        # activations downstream; default keeps f32 fidelity.
        self.out_dtype = jnp.dtype(out_dtype) if out_dtype is not None else self.pe.dtype

        l_chunk = min(_L_CHUNK, _round_up(max_len, _SUBLANE))
        l_pad = _round_up(max_len, l_chunk)
        plane_bytes = l_pad * d_model * 2
        # Resident-table one-hot path only when the (double-buffered) planes fit
        # comfortably in every chip's per-core VMEM; otherwise DMA row gather.
        self._use_onehot = (max_len < _ONEHOT_MAX_LEN) and (4 * plane_bytes <= (32 << 20))

        if self._use_onehot:
            # Hoisted, one-time table prep (NOT in the jitted per-call path):
            # pad L and split f32 table into two bf16 planes, p0 + p1 ~= pe.
            pe_f32 = jnp.zeros((l_pad, d_model), jnp.float32).at[:max_len].set(
                self.pe.astype(jnp.float32))
            p0 = pe_f32.astype(jnp.bfloat16)
            p1 = (pe_f32 - p0.astype(jnp.float32)).astype(jnp.bfloat16)
            self._p0, self._p1 = p0, p1
            self._l_chunk = l_chunk

    def __call__(self, x):
        if self._use_onehot:
            return _onehot_forward(x, self._p0, self._p1,
                                   max_len=self.max_len,
                                   l_chunk=self._l_chunk,
                                   out_dtype=self.out_dtype)
        return _dma_forward(x, self.pe, max_len=self.max_len,
                            out_dtype=self.out_dtype)


if __name__ == "__main__":
    d_model = 32
    max_len = 64
    offset_start = 0
    dropout_p = 0.1    # unused (eval mode)

    module = ReturnPositionalEncoding(d_model, dropout_p, max_len=max_len,
                                      offset_start=offset_start)

    key = jax.random.PRNGKey(0)
    # x: integer "positions" tensor, e.g. (batch=2, seq=8)
    x = jax.random.randint(key, (2, 8), 0, max_len, dtype=jnp.int32)

    out = jax.block_until_ready(module(x))

    # pure-JAX reference (pe[x] gather; dropout = identity in eval mode)
    ref = jnp.take(module.pe, x, axis=0)
    assert out.shape == (2, 8, d_model), out.shape
    # 2-plane bf16 reconstruction of the f32 table: |err| <~ 5e-6 for |pe| <= 1.
    assert jnp.allclose(out, ref, atol=2e-5), float(jnp.max(jnp.abs(out - ref)))

    print("KERNEL_OK")
</pallas_src>

<mosaic_0001>
module attributes {stable_mosaic.version = 11 : i64} {
  func.func @_onehot_gather_kernel(%arg0: i32, %arg1: memref<16x1xi32, #tpu.memory_space<vmem>>, %arg2: memref<64x32xbf16, #tpu.memory_space<vmem>>, %arg3: memref<64x32xbf16, #tpu.memory_space<vmem>>, %arg4: memref<16x32xf32, #tpu.memory_space<vmem>>) attributes {dimension_semantics = [#tpu.dimension_semantics<parallel>], iteration_bounds = array<i64: 1>, scalar_prefetch = 0 : i64, scratch_operands = 0 : i64, tpu.core_type = #tpu.core_type<tc>, window_params = [{transform_indices = @transform_0, window_bounds = array<i64: 16, 1>}, {pipeline_mode = #tpu.pipeline_mode<synchronous>, transform_indices = @transform_1, window_bounds = array<i64: 64, 32>}, {pipeline_mode = #tpu.pipeline_mode<synchronous>, transform_indices = @transform_2, window_bounds = array<i64: 64, 32>}, {transform_indices = @transform_3, window_bounds = array<i64: 16, 32>}]} {
    %c0 = arith.constant 0 : index
    %c0_0 = arith.constant 0 : index
    %0 = vector.load %arg1[%c0, %c0_0] : memref<16x1xi32, #tpu.memory_space<vmem>>, vector<16x1xi32>
    %1 = tpu.iota {dimensions = array<i32: 1>} : vector<16x64xi32>
    %cst = arith.constant 0.000000e+00 : f32
    %2 = vector.broadcast %cst : f32 to vector<16x32xf32>
    %c0_i32 = arith.constant 0 : i32
    %c64_i32 = arith.constant 64 : i32
    %3 = arith.muli %c0_i32, %c64_i32 : i32
    %4 = tpu.assume_multiple %3, 64 : i32
    %5 = vector.broadcast %4 : i32 to vector<16x1xi32>
    %6 = arith.subi %0, %5 : vector<16x1xi32>
    %7 = vector.broadcast %6 : vector<16x1xi32> to vector<16x64xi32>
    %8 = arith.cmpi eq, %1, %7 : vector<16x64xi32>
    %9 = arith.extui %8 : vector<16x64xi1> to vector<16x64xi32>
    %10 = arith.sitofp %9 : vector<16x64xi32> to vector<16x64xf32>
    %11 = arith.truncf %10 : vector<16x64xf32> to vector<16x64xbf16>
    %12 = arith.index_cast %4 : i32 to index
    %c0_1 = arith.constant 0 : index
    %13 = vector.load %arg2[%12, %c0_1] : memref<64x32xbf16, #tpu.memory_space<vmem>>, vector<64x32xbf16>
    %cst_2 = arith.constant dense<0.000000e+00> : vector<16x32xf32>
    %14 = tpu.matmul %11, %13, %cst_2 {dimension_numbers = #tpu.dot_dimension_numbers<[1], [0], [0], [1], [0, 0, 1, 1], [], []>} : vector<16x64xbf16>, vector<64x32xbf16>, vector<16x32xf32> -> vector<16x32xf32>
    %15 = arith.addf %2, %14 : vector<16x32xf32>
    %16 = arith.index_cast %4 : i32 to index
    %c0_3 = arith.constant 0 : index
    %17 = vector.load %arg3[%16, %c0_3] : memref<64x32xbf16, #tpu.memory_space<vmem>>, vector<64x32xbf16>
    %cst_4 = arith.constant dense<0.000000e+00> : vector<16x32xf32>
    %18 = tpu.matmul %11, %17, %cst_4 {dimension_numbers = #tpu.dot_dimension_numbers<[1], [0], [0], [1], [0, 0, 1, 1], [], []>} : vector<16x64xbf16>, vector<64x32xbf16>, vector<16x32xf32> -> vector<16x32xf32>
    %19 = arith.addf %15, %18 : vector<16x32xf32>
    %c1_i32 = arith.constant 1 : i32
    %c0_5 = arith.constant 0 : index
    %c0_6 = arith.constant 0 : index
    %20 = vector.load %arg4[%c0_5, %c0_6] : memref<16x32xf32, #tpu.memory_space<vmem>>, vector<16x32xf32>
    tpu.vector_store %arg4[%c0_5, %c0_6], %19 {strides = array<i32>} : memref<16x32xf32, #tpu.memory_space<vmem>>, vector<16x32xf32>,
    return
  }
  func.func @transform_0(%arg0: i32) -> (i32, i32) {
    %c0_i32 = arith.constant 0 : i32
    %c0_i32_0 = arith.constant 0 : i32
    return %arg0, %c0_i32 : i32, i32
  }
  func.func @transform_1(%arg0: i32) -> (i32, i32) {
    %c0_i32 = arith.constant 0 : i32
    %c0_i32_0 = arith.constant 0 : i32
    %c0_i32_1 = arith.constant 0 : i32
    return %c0_i32, %c0_i32_0 : i32, i32
  }
  func.func @transform_2(%arg0: i32) -> (i32, i32) {
    %c0_i32 = arith.constant 0 : i32
    %c0_i32_0 = arith.constant 0 : i32
    %c0_i32_1 = arith.constant 0 : i32
    return %c0_i32, %c0_i32_0 : i32, i32
  }
  func.func @transform_3(%arg0: i32) -> (i32, i32) {
    %c0_i32 = arith.constant 0 : i32
    %c0_i32_0 = arith.constant 0 : i32
    return %arg0, %c0_i32 : i32, i32
  }
}

</mosaic_0001>

<llo_original>
// kernel: _onehot_forward.1
$region0: #{_onehot_forward.1}
  #allocation0 [shape = 'u32[]', space=smem, size = 0x4, offset = 0x4, fixed_abs, tag = 'smem constant byte address 0x4 - core index']
  #allocation1 [shape = 'u32[144,128]{1,0:T(1,128)}', space=vmem, size = 0x12000, scoped, tag = 'internal scratch']
  %s0 = inlined_call_operand.vmem [shape: s32[16,1], index: 0, kind: input, shape index: {}]
  %s1 = inlined_call_operand.vmem [shape: bf16[64,32], index: 1, kind: input, shape index: {}]
  %s2 = inlined_call_operand.vmem [shape: bf16[64,32], index: 2, kind: input, shape index: {}]
  %s3 = inlined_call_operand.hbm [shape: f32[16,32], index: 3, kind: output, shape index: {}]
  %s4 = sld [smem:[#allocation0]]
  $region22: #{_onehot_forward.1} parent=0
    _
  %s6 = ssub.s32 1, %s4
  %s7 = scalar_select 0, %s6, %s4
  $region1: #{_onehot_forward.1} parent=0
    #allocation2 [shape = 'u8[8192]{0}', space=vmem, size = 0x2000, scoped, tag = 'output window, operand 0, single buffered']
    #allocation3 [shape = 's32[1]{0}', space=sflag, size = 0x4, scoped, tag = 'scoped memory for _onehot_forward.1']
    %8 = vsyncpa [#allocation3], 0
    // Predicated region
    $region2: #{_onehot_forward.1} parent=1 // pred_check
      _
    $region3: #{_onehot_forward.1} parent=1 // pred_check_branch
      %10 = sbr.rel (0) target = $region5
    $region4: #{_onehot_forward.1} parent=1 // pred_region
      _
    $region5: #{_onehot_forward.1} parent=1 // pred_fallthru
      _
    // Predicated region
    $region6: #{_onehot_forward.1} parent=1 // pred_check
      _
    $region7: #{_onehot_forward.1} parent=1 // pred_check_branch
      %12 = sbr.rel (0) target = $region9
    $region8: #{_onehot_forward.1} parent=1 // pred_region
      _
    $region9: #{_onehot_forward.1} parent=1 // pred_fallthru
      _
    // Predicated region
    $region10: #{_onehot_forward.1} parent=1 // pred_check
      _
    $region11: #{_onehot_forward.1} parent=1 // pred_check_branch
      %14 = sbr.rel (0) target = $region13
    $region12: #{_onehot_forward.1} parent=1 // pred_region
      _
    $region13: #{_onehot_forward.1} parent=1 // pred_fallthru
      _
    %v16 = vld [vmem:[%s0] sm:$0xff]
    %v17 = vld [vmem:[%s0 + $0x8] sm:$0xff]
    %v18 = vlaneseq
    %v19 = vand.u32 %v18, 127
    %v20 = vstv 0
    %v21 = vsub.s32 %v16, %v20
    %v22 = vsub.s32 %v17, %v20
    %23 = vset.pattern.permute.xlu0 0
    %24 = vperm.xlu0 %23, %v21
    %v25 = vpop.permute.xlu0 %24
    %26 = vset.pattern.permute.xlu0 0
    %27 = vperm.xlu0 %26, %v22
    %v28 = vpop.permute.xlu0 %27
    %vm29 = vcmp.eq.s32.totalorder %v19, %v25
    %vm30 = vcmp.eq.s32.totalorder %v19, %v28
    %v31 = vsel %vm29, 1, 0
    %v32 = vsel %vm30, 1, 0
    %v33 = vcvt.s32.f32 %v31
    %v34 = vcvt.s32.f32 %v32
    %v35 = vpack.c.bf16 %v34, %v33
    %v36 = vld [vmem:[%s1] sm:$0xf]
    %v37 = vld [vmem:[%s1 + $0x4] sm:$0xf]
    %v38 = vld [vmem:[%s1 + $0x8] sm:$0xf]
    %v39 = vld [vmem:[%s1 + $0xc] sm:$0xf]
    %v40 = vld [vmem:[%s1 + $0x10] sm:$0xf]
    %v41 = vld [vmem:[%s1 + $0x14] sm:$0xf]
    %v42 = vld [vmem:[%s1 + $0x18] sm:$0xf]
    %v43 = vld [vmem:[%s1 + $0x1c] sm:$0xf]
    %v44 = vld [vmem:[%s2] sm:$0xf]
    %v45 = vld [vmem:[%s2 + $0x4] sm:$0xf]
    %v46 = vld [vmem:[%s2 + $0x8] sm:$0xf]
    %v47 = vld [vmem:[%s2 + $0xc] sm:$0xf]
    %v48 = vld [vmem:[%s2 + $0x10] sm:$0xf]
    %v49 = vld [vmem:[%s2 + $0x14] sm:$0xf]
    %v50 = vld [vmem:[%s2 + $0x18] sm:$0xf]
    %v51 = vld [vmem:[%s2 + $0x1c] sm:$0xf]
    %v60 = vunpack.c.l.b16 %v44
    %v61 = vunpack.c.l.b16 %v45
    %v62 = vunpack.c.l.b16 %v46
    %v63 = vunpack.c.l.b16 %v47
    %v64 = vunpack.c.l.b16 %v48
    %v65 = vunpack.c.l.b16 %v49
    %v66 = vunpack.c.l.b16 %v50
    %v67 = vunpack.c.l.b16 %v51
    %v68 = vpack.c.b16 %v61, %v60
    %v69 = vpack.c.b16 %v63, %v62
    %v70 = vpack.c.b16 %v65, %v64
    %v71 = vpack.c.b16 %v67, %v66
    %vm76 = vcmask 523264
    %v78 = vsel %vm76, %v35, 0
    %80 = vmatprep.subr.bf16.mxu0 0
    %81 = vmatpush1.bf16.msra.mxu0 %v68
    %82 = vmatprep.subr.bf16.mxu0 0
    %83 = vmatpush1.bf16.msra.mxu0 %v69
    %84 = vmatprep.subr.bf16.mxu0 0
    %85 = vmatpush1.bf16.msra.mxu0 %v70
    %86 = vmatprep.subr.bf16.mxu0 0
    %87 = vmatpush1.bf16.msra.mxu0 %v71
    %88 = vmatprep.subr.bf16.mxu0 0
    %89 = vmatpush1.bf16.msra.mxu0 0
    %90 = vmatprep.subr.bf16.mxu0 0
    %91 = vmatpush1.bf16.msra.mxu0 0
    %92 = vmatprep.subr.bf16.mxu0 0
    %93 = vmatpush1.bf16.msra.mxu0 0
    %94 = vmatprep.subr.bf16.mxu0 0
    %95 = vmatpush1.bf16.msra.mxu0 0
    %96 = vmatprep.subr.bf16.mxu0 0
    %97 = vmatpush1.bf16.msra.mxu0 0
    %98 = vmatprep.subr.bf16.mxu0 0
    %99 = vmatpush1.bf16.msra.mxu0 0
    %100 = vmatprep.subr.bf16.mxu0 0
    %101 = vmatpush1.bf16.msra.mxu0 0
    %102 = vmatprep.subr.bf16.mxu0 0
    %103 = vmatpush1.bf16.msra.mxu0 0
    %104 = vmatprep.subr.bf16.mxu0 0
    %105 = vmatpush1.bf16.msra.mxu0 0
    %106 = vmatprep.subr.bf16.mxu0 0
    %107 = vmatpush1.bf16.msra.mxu0 0
    %108 = vmatprep.subr.bf16.mxu0 0
    %109 = vmatpush1.bf16.msra.mxu0 0
    %110 = vmatprep.subr.bf16.mxu0 0
    %111 = vmatpush1.bf16.msra.mxu0 0
    %112 = vmatprep.mubr.bf16.mxu0 0
    %113 = vmatmul.mubr.bf16.gmra.mrb[0].mxu0 %v78
    %v114 = vpop.f32.mrb[0].mxu0
    %v115 = vadd.f32 0.0, %v114
    %v116 = vpop.f32.mrb[0].mxu0
    %v117 = vpop.f32.mrb[0].mxu0
    %v118 = vadd.f32 0.0, %v117
    %v119 = vpop.f32.mrb[0].mxu0
    %120 = vdwg.mxu0
    %v129 = vunpack.c.l.b16 %v36
    %v130 = vunpack.c.l.b16 %v37
    %v131 = vunpack.c.l.b16 %v38
    %v132 = vunpack.c.l.b16 %v39
    %v133 = vunpack.c.l.b16 %v40
    %v134 = vunpack.c.l.b16 %v41
    %v135 = vunpack.c.l.b16 %v42
    %v136 = vunpack.c.l.b16 %v43
    %v137 = vpack.c.b16 %v130, %v129
    %v138 = vpack.c.b16 %v132, %v131
    %v139 = vpack.c.b16 %v134, %v133
    %v140 = vpack.c.b16 %v136, %v135
    %145 = vmatprep.subr.bf16.mxu0 0
    %146 = vmatpush1.bf16.msra.mxu0 %v137
    %147 = vmatprep.subr.bf16.mxu0 0
    %148 = vmatpush1.bf16.msra.mxu0 %v138
    %149 = vmatprep.subr.bf16.mxu0 0
    %150 = vmatpush1.bf16.msra.mxu0 %v139
    %151 = vmatprep.subr.bf16.mxu0 0
    %152 = vmatpush1.bf16.msra.mxu0 %v140
    %153 = vmatprep.subr.bf16.mxu0 0
    %154 = vmatpush1.bf16.msra.mxu0 0
    %155 = vmatprep.subr.bf16.mxu0 0
    %156 = vmatpush1.bf16.msra.mxu0 0
    %157 = vmatprep.subr.bf16.mxu0 0
    %158 = vmatpush1.bf16.msra.mxu0 0
    %159 = vmatprep.subr.bf16.mxu0 0
    %160 = vmatpush1.bf16.msra.mxu0 0
    %161 = vmatprep.subr.bf16.mxu0 0
    %162 = vmatpush1.bf16.msra.mxu0 0
    %163 = vmatprep.subr.bf16.mxu0 0
    %164 = vmatpush1.bf16.msra.mxu0 0
    %165 = vmatprep.subr.bf16.mxu0 0
    %166 = vmatpush1.bf16.msra.mxu0 0
    %167 = vmatprep.subr.bf16.mxu0 0
    %168 = vmatpush1.bf16.msra.mxu0 0
    %169 = vmatprep.subr.bf16.mxu0 0
    %170 = vmatpush1.bf16.msra.mxu0 0
    %171 = vmatprep.subr.bf16.mxu0 0
    %172 = vmatpush1.bf16.msra.mxu0 0
    %173 = vmatprep.subr.bf16.mxu0 0
    %174 = vmatpush1.bf16.msra.mxu0 0
    %175 = vmatprep.subr.bf16.mxu0 0
    %176 = vmatpush1.bf16.msra.mxu0 0
    %177 = vmatprep.mubr.bf16.mxu0 0
    %178 = vmatmul.mubr.bf16.gmra.mrb[0].mxu0 %v78
    %v179 = vpop.f32.mrb[0].mxu0
    %v180 = vadd.f32 %v115, %v179
    %v181 = vpop.f32.mrb[0].mxu0
    %v182 = vpop.f32.mrb[0].mxu0
    %v183 = vadd.f32 %v118, %v182
    %v184 = vpop.f32.mrb[0].mxu0
    %185 = vdwg.mxu0
    %vm186 = vcmask 261120
    %187 = vst.msk [vmem:[#allocation2] sm:$0xff] %vm186, %v180
    %188 = vst.msk [vmem:[#allocation2 + $0x8] sm:$0xff] %vm186, %v183
    // Predicated region
    $region14: #{_onehot_forward.1} parent=1 // pred_check
      _
    $region15: #{_onehot_forward.1} parent=1 // pred_check_branch
      %190 = sbr.rel (0) target = $region17
    $region16: #{_onehot_forward.1} parent=1 // pred_region
      %s192 = ssub.s32 256, 256
      %193 = vsyncadd [#allocation3], %s192
      %s194 = sshll.u32 [#allocation2], 4
      %s195 = int_to_ptr.vmem [resolvable:$true] %s194
      %200 = dma.vmem_to_hbm [thread:$0]  %s195, 256, %s3, [#allocation3], 128, 128, 8
    $region17: #{_onehot_forward.1} parent=1 // pred_fallthru
      _
    // Predicated region
    $region18: #{_onehot_forward.1} parent=1 // pred_check
      _
    $region19: #{_onehot_forward.1} parent=1 // pred_check_branch
      %202 = sbr.rel (0) target = $region21
    $region20: #{_onehot_forward.1} parent=1 // pred_region
      %203 = dma.done [#allocation3], 256
    $region21: #{_onehot_forward.1} parent=1 // pred_fallthru
      _
    %204 = vsyncpa [#allocation3], 1

</llo_original>
